<compile_context>
chip_gen: v5e
topology: v5e:2x2
jax: 0.10.0
libtpu: 0.0.40
codegen_flags: <defaults>
</compile_context>

<pallas_src>
import functools

import numpy as np

import jax
import jax.numpy as jnp
from jax.experimental import pallas as pl
from jax.experimental.pallas import tpu as pltpu


def _round_up(x, m):
    return ((x + m - 1) // m) * m


def _multi_categorical_kernel(x_ref, logp_ref, mode_ref, *, action_dim):
    """Row-tile kernel: per-split log-softmax + per-split argmax.

    x_ref    : (TM, D)  logits tile
    logp_ref : (TM, D)  per-split log-softmax (normalized Categorical logits)
    mode_ref : (TM, S)  int32 per-split argmax (== MultiCategorical.mean/.mode)

    Rows are fully independent, so the garbage rows Pallas pads into a partial
    last block are harmless: their writeback is masked.
    """
    TM, D = x_ref.shape
    S = mode_ref.shape[-1]

    x = x_ref[...].astype(jnp.float32)                       # (TM, D)

    # (1, D)/(1, S) iotas; jnp.where broadcasts them so we never materialize
    # (TM, D) int32 index tensors (lower vreg/VMEM pressure).
    lane = jax.lax.broadcasted_iota(jnp.int32, (1, D), 1)
    mode_lane = jax.lax.broadcasted_iota(jnp.int32, (1, S), 1)

    neg_inf = float("-inf")                                   # Python literal only
    m_full = jnp.zeros((TM, D), jnp.float32)                  # per-split max, scattered
    mode = jnp.zeros((TM, S), jnp.int32)

    # Pass 1: per-split max (scattered back to full width) + per-split argmax.
    start = 0
    for j, n in enumerate(action_dim):
        in_seg = (lane >= start) & (lane < start + n)         # (1, D) constant mask
        seg = jnp.where(in_seg, x, neg_inf)                   # (TM, D)
        m = jnp.max(seg, axis=-1, keepdims=True)              # (TM, 1)
        m_full = jnp.where(in_seg, m, m_full)
        # first-occurrence argmax, split-relative index
        hit = jnp.where(in_seg & (seg == m), lane, D)         # (TM, D) int32
        arg = jnp.min(hit, axis=-1, keepdims=True) - start    # (TM, 1)
        mode = jnp.where(mode_lane == j, arg, mode)
        start += n

    # One full-width exp for ALL splits (EUP has a single bundle slot).  Every
    # lane belongs to exactly one split, so x - m_full <= 0 lane-wise.
    e = jnp.exp(x - m_full)                                    # (TM, D)

    # Pass 2: per-split sum of exp, scattered back as the log-denominator.
    logs_full = jnp.zeros((TM, D), jnp.float32)
    start = 0
    for n in action_dim:
        in_seg = (lane >= start) & (lane < start + n)
        s = jnp.sum(jnp.where(in_seg, e, 0.0), axis=-1, keepdims=True)
        logs_full = jnp.where(in_seg, jnp.log(s), logs_full)
        start += n

    # One dense store per output per tile.
    logp_ref[...] = (x - m_full - logs_full).astype(logp_ref.dtype)
    mode_ref[...] = mode


def multi_categorical_head(x, action_dim, *, row_tile=None, out_dtype=None,
                           vmem_budget_bytes=8 << 20):
    """Pallas implementation of MultiCategoricalHead(action_dim)(x).

    Returns (normalized_logits, mode):
      normalized_logits: same shape as x, per-split log-softmax (the internal
                         `logits` of each Categorical component).
      mode             : x.shape[:-1] + (len(action_dim),), int32 per-split
                         argmax (== MultiCategorical.mean / .mode).
    """
    action_dim = tuple(int(n) for n in action_dim)
    D = sum(action_dim)
    S = len(action_dim)
    assert x.shape[-1] == D, (x.shape, action_dim)
    out_dtype = x.dtype if out_dtype is None else out_dtype

    lead = x.shape[:-1]
    R = int(np.prod(lead)) if lead else 1
    x2 = x.reshape(R, D)            # contiguous reshape: no pad / slice round trips

    in_bytes = jnp.dtype(x.dtype).itemsize
    out_bytes = jnp.dtype(out_dtype).itemsize

    # --- row-tile sizing: honest VMEM accounting --------------------------------
    # Pipeline tiles are double-buffered and lane-padded to 128; the kernel keeps
    # ~5-6 live (TM, D) f32 intermediates (x, m_full, e, logs_full, logp, slack).
    d_pad = _round_up(D, 128)
    s_pad = _round_up(S, 128)
    if row_tile is None:
        pipeline_per_row = 2 * (in_bytes * d_pad + out_bytes * d_pad + 4 * s_pad)
        temps_per_row = 6 * 4 * d_pad
        per_row = pipeline_per_row + temps_per_row
        budget_tile = max(vmem_budget_bytes // per_row, 8)
        # Prefer >= ~4 grid steps: DMA/compute overlap + megacore sharding on v7x.
        steps_tile = _round_up(pl.cdiv(R, 4), 8)
        row_tile = min(budget_tile, steps_tile)
    row_tile = max(8, (int(row_tile) // 8) * 8)

    grid = (pl.cdiv(R, row_tile),)   # partial last block handled by Pallas masking

    kernel = functools.partial(_multi_categorical_kernel, action_dim=action_dim)

    cost = pl.CostEstimate(
        flops=int(R * D * (4 * S + 6)),
        transcendentals=int(R * (D + S)),      # one exp/elem + one log/split/row
        bytes_accessed=int(R * (in_bytes * D + out_bytes * D + 4 * S)),
    )

    logp, mode = pl.pallas_call(
        kernel,
        out_shape=(
            jax.ShapeDtypeStruct((R, D), out_dtype),
            jax.ShapeDtypeStruct((R, S), jnp.int32),
        ),
        grid_spec=pltpu.PrefetchScalarGridSpec(
            num_scalar_prefetch=0,
            grid=grid,
            in_specs=[pl.BlockSpec((row_tile, D), lambda i: (i, 0))],
            out_specs=(
                pl.BlockSpec((row_tile, D), lambda i: (i, 0)),
                pl.BlockSpec((row_tile, S), lambda i: (i, 0)),
            ),
        ),
        compiler_params=pltpu.CompilerParams(
            dimension_semantics=("parallel",),
            vmem_limit_bytes=32 << 20,
        ),
        cost_estimate=cost,
    )(x2)

    return logp.reshape(*lead, D), mode.reshape(*lead, S)


def _reference(x, action_dim):
    """Pure-JAX reference matching the torch semantics."""
    split_points = np.cumsum(np.asarray(action_dim))[:-1].tolist()
    splits = jnp.split(x.astype(jnp.float32), split_points, axis=-1)
    logps = [s - jax.scipy.special.logsumexp(s, axis=-1, keepdims=True)
             for s in splits]
    modes = [jnp.argmax(s, axis=-1).astype(jnp.int32) for s in splits]
    return jnp.concatenate(logps, axis=-1), jnp.stack(modes, axis=-1)


if __name__ == "__main__":
    # Small shapes consistent with the module: logits [B, T, sum(action_dim)].
    B, T = 2, 8
    action_dim = [3, 4, 5]          # MultiDiscrete nvec
    D = sum(action_dim)

    key = jax.random.PRNGKey(0)
    x = jax.random.normal(key, (B, T, D), dtype=jnp.float32)

    logp, mode = multi_categorical_head(x, action_dim)
    logp, mode = jax.block_until_ready((logp, mode))

    ref_logp, ref_mode = _reference(x, action_dim)
    assert logp.shape == (B, T, D) and mode.shape == (B, T, len(action_dim))
    assert jnp.allclose(logp.astype(jnp.float32), ref_logp, atol=1e-5), "log-prob mismatch"
    assert jnp.array_equal(mode, ref_mode), "mode mismatch"

    # Also exercise rows that are NOT a multiple of the tile (partial last block).
    x_odd = jax.random.normal(jax.random.PRNGKey(1), (3, 7, D), jnp.float32)
    logp_o, mode_o = multi_categorical_head(x_odd, action_dim, row_tile=8)
    logp_o, mode_o = jax.block_until_ready((logp_o, mode_o))
    ref_logp_o, ref_mode_o = _reference(x_odd, action_dim)
    assert jnp.allclose(logp_o.astype(jnp.float32), ref_logp_o, atol=1e-5), \
        "odd-shape log-prob mismatch"
    assert jnp.array_equal(mode_o, ref_mode_o), "odd-shape mode mismatch"

    print("KERNEL_OK")
</pallas_src>

<mosaic_0001>
module attributes {stable_mosaic.version = 11 : i64} {
  func.func @_multi_categorical_kernel(%arg0: i32, %arg1: memref<8x12xf32, #tpu.memory_space<vmem>>, %arg2: memref<8x12xf32, #tpu.memory_space<vmem>>, %arg3: memref<8x3xi32, #tpu.memory_space<vmem>>) attributes {dimension_semantics = [#tpu.dimension_semantics<parallel>], iteration_bounds = array<i64: 2>, scalar_prefetch = 0 : i64, scratch_operands = 0 : i64, tpu.core_type = #tpu.core_type<tc>, window_params = [{transform_indices = @transform_0, window_bounds = array<i64: 8, 12>}, {transform_indices = @transform_1, window_bounds = array<i64: 8, 12>}, {transform_indices = @transform_2, window_bounds = array<i64: 8, 3>}]} {
    %c0 = arith.constant 0 : index
    %c0_0 = arith.constant 0 : index
    %0 = vector.load %arg1[%c0, %c0_0] : memref<8x12xf32, #tpu.memory_space<vmem>>, vector<8x12xf32>
    %1 = tpu.iota {dimensions = array<i32: 1>} : vector<1x12xi32>
    %2 = tpu.iota {dimensions = array<i32: 1>} : vector<1x3xi32>
    %cst = arith.constant 0.000000e+00 : f32
    %3 = vector.broadcast %cst : f32 to vector<8x12xf32>
    %c0_i32 = arith.constant 0 : i32
    %4 = vector.broadcast %c0_i32 : i32 to vector<8x3xi32>
    %c0_i32_1 = arith.constant 0 : i32
    %5 = vector.broadcast %c0_i32_1 : i32 to vector<1x12xi32>
    %6 = arith.cmpi sge, %1, %5 : vector<1x12xi32>
    %c3_i32 = arith.constant 3 : i32
    %7 = vector.broadcast %c3_i32 : i32 to vector<1x12xi32>
    %8 = arith.cmpi slt, %1, %7 : vector<1x12xi32>
    %9 = arith.andi %6, %8 : vector<1x12xi1>
    %cst_2 = arith.constant 0xFF800000 : f32
    %10 = vector.shape_cast %9 : vector<1x12xi1> to vector<1x12xi1>
    %11 = vector.broadcast %10 : vector<1x12xi1> to vector<8x12xi1>
    %12 = vector.broadcast %cst_2 : f32 to vector<8x12xf32>
    %13 = arith.select %11, %0, %12 : vector<8x12xi1>, vector<8x12xf32>
    %cst_3 = arith.constant dense<0xFF800000> : vector<8xf32>
    %14 = vector.multi_reduction <maximumf>, %13, %cst_3 [1] : vector<8x12xf32> to vector<8xf32>
    %15 = vector.shape_cast %14 : vector<8xf32> to vector<8x1xf32>
    %16 = vector.shape_cast %9 : vector<1x12xi1> to vector<1x12xi1>
    %17 = vector.broadcast %16 : vector<1x12xi1> to vector<8x12xi1>
    %18 = vector.shape_cast %15 : vector<8x1xf32> to vector<8x1xf32>
    %19 = vector.broadcast %18 : vector<8x1xf32> to vector<8x12xf32>
    %20 = arith.select %17, %19, %3 : vector<8x12xi1>, vector<8x12xf32>
    %21 = vector.broadcast %15 : vector<8x1xf32> to vector<8x12xf32>
    %22 = arith.cmpf oeq, %13, %21 : vector<8x12xf32>
    %23 = vector.broadcast %9 : vector<1x12xi1> to vector<8x12xi1>
    %24 = arith.andi %23, %22 : vector<8x12xi1>
    %c12_i32 = arith.constant 12 : i32
    %25 = vector.shape_cast %1 : vector<1x12xi32> to vector<1x12xi32>
    %26 = vector.broadcast %25 : vector<1x12xi32> to vector<8x12xi32>
    %27 = vector.broadcast %c12_i32 : i32 to vector<8x12xi32>
    %28 = arith.select %24, %26, %27 : vector<8x12xi1>, vector<8x12xi32>
    %cst_4 = arith.constant dense<2147483647> : vector<8xi32>
    %29 = vector.multi_reduction <minsi>, %28, %cst_4 [1] : vector<8x12xi32> to vector<8xi32>
    %30 = vector.shape_cast %29 : vector<8xi32> to vector<8x1xi32>
    %c0_i32_5 = arith.constant 0 : i32
    %31 = vector.broadcast %c0_i32_5 : i32 to vector<8x1xi32>
    %32 = arith.subi %30, %31 : vector<8x1xi32>
    %c0_i32_6 = arith.constant 0 : i32
    %33 = vector.broadcast %c0_i32_6 : i32 to vector<1x3xi32>
    %34 = arith.cmpi eq, %2, %33 : vector<1x3xi32>
    %35 = vector.shape_cast %34 : vector<1x3xi1> to vector<1x3xi1>
    %36 = vector.broadcast %35 : vector<1x3xi1> to vector<8x3xi1>
    %37 = vector.shape_cast %32 : vector<8x1xi32> to vector<8x1xi32>
    %38 = vector.broadcast %37 : vector<8x1xi32> to vector<8x3xi32>
    %39 = arith.select %36, %38, %4 : vector<8x3xi1>, vector<8x3xi32>
    %c3_i32_7 = arith.constant 3 : i32
    %40 = vector.broadcast %c3_i32_7 : i32 to vector<1x12xi32>
    %41 = arith.cmpi sge, %1, %40 : vector<1x12xi32>
    %c7_i32 = arith.constant 7 : i32
    %42 = vector.broadcast %c7_i32 : i32 to vector<1x12xi32>
    %43 = arith.cmpi slt, %1, %42 : vector<1x12xi32>
    %44 = arith.andi %41, %43 : vector<1x12xi1>
    %cst_8 = arith.constant 0xFF800000 : f32
    %45 = vector.shape_cast %44 : vector<1x12xi1> to vector<1x12xi1>
    %46 = vector.broadcast %45 : vector<1x12xi1> to vector<8x12xi1>
    %47 = vector.broadcast %cst_8 : f32 to vector<8x12xf32>
    %48 = arith.select %46, %0, %47 : vector<8x12xi1>, vector<8x12xf32>
    %cst_9 = arith.constant dense<0xFF800000> : vector<8xf32>
    %49 = vector.multi_reduction <maximumf>, %48, %cst_9 [1] : vector<8x12xf32> to vector<8xf32>
    %50 = vector.shape_cast %49 : vector<8xf32> to vector<8x1xf32>
    %51 = vector.shape_cast %44 : vector<1x12xi1> to vector<1x12xi1>
    %52 = vector.broadcast %51 : vector<1x12xi1> to vector<8x12xi1>
    %53 = vector.shape_cast %50 : vector<8x1xf32> to vector<8x1xf32>
    %54 = vector.broadcast %53 : vector<8x1xf32> to vector<8x12xf32>
    %55 = arith.select %52, %54, %20 : vector<8x12xi1>, vector<8x12xf32>
    %56 = vector.broadcast %50 : vector<8x1xf32> to vector<8x12xf32>
    %57 = arith.cmpf oeq, %48, %56 : vector<8x12xf32>
    %58 = vector.broadcast %44 : vector<1x12xi1> to vector<8x12xi1>
    %59 = arith.andi %58, %57 : vector<8x12xi1>
    %c12_i32_10 = arith.constant 12 : i32
    %60 = vector.shape_cast %1 : vector<1x12xi32> to vector<1x12xi32>
    %61 = vector.broadcast %60 : vector<1x12xi32> to vector<8x12xi32>
    %62 = vector.broadcast %c12_i32_10 : i32 to vector<8x12xi32>
    %63 = arith.select %59, %61, %62 : vector<8x12xi1>, vector<8x12xi32>
    %cst_11 = arith.constant dense<2147483647> : vector<8xi32>
    %64 = vector.multi_reduction <minsi>, %63, %cst_11 [1] : vector<8x12xi32> to vector<8xi32>
    %65 = vector.shape_cast %64 : vector<8xi32> to vector<8x1xi32>
    %c3_i32_12 = arith.constant 3 : i32
    %66 = vector.broadcast %c3_i32_12 : i32 to vector<8x1xi32>
    %67 = arith.subi %65, %66 : vector<8x1xi32>
    %c1_i32 = arith.constant 1 : i32
    %68 = vector.broadcast %c1_i32 : i32 to vector<1x3xi32>
    %69 = arith.cmpi eq, %2, %68 : vector<1x3xi32>
    %70 = vector.shape_cast %69 : vector<1x3xi1> to vector<1x3xi1>
    %71 = vector.broadcast %70 : vector<1x3xi1> to vector<8x3xi1>
    %72 = vector.shape_cast %67 : vector<8x1xi32> to vector<8x1xi32>
    %73 = vector.broadcast %72 : vector<8x1xi32> to vector<8x3xi32>
    %74 = arith.select %71, %73, %39 : vector<8x3xi1>, vector<8x3xi32>
    %c7_i32_13 = arith.constant 7 : i32
    %75 = vector.broadcast %c7_i32_13 : i32 to vector<1x12xi32>
    %76 = arith.cmpi sge, %1, %75 : vector<1x12xi32>
    %c12_i32_14 = arith.constant 12 : i32
    %77 = vector.broadcast %c12_i32_14 : i32 to vector<1x12xi32>
    %78 = arith.cmpi slt, %1, %77 : vector<1x12xi32>
    %79 = arith.andi %76, %78 : vector<1x12xi1>
    %cst_15 = arith.constant 0xFF800000 : f32
    %80 = vector.shape_cast %79 : vector<1x12xi1> to vector<1x12xi1>
    %81 = vector.broadcast %80 : vector<1x12xi1> to vector<8x12xi1>
    %82 = vector.broadcast %cst_15 : f32 to vector<8x12xf32>
    %83 = arith.select %81, %0, %82 : vector<8x12xi1>, vector<8x12xf32>
    %cst_16 = arith.constant dense<0xFF800000> : vector<8xf32>
    %84 = vector.multi_reduction <maximumf>, %83, %cst_16 [1] : vector<8x12xf32> to vector<8xf32>
    %85 = vector.shape_cast %84 : vector<8xf32> to vector<8x1xf32>
    %86 = vector.shape_cast %79 : vector<1x12xi1> to vector<1x12xi1>
    %87 = vector.broadcast %86 : vector<1x12xi1> to vector<8x12xi1>
    %88 = vector.shape_cast %85 : vector<8x1xf32> to vector<8x1xf32>
    %89 = vector.broadcast %88 : vector<8x1xf32> to vector<8x12xf32>
    %90 = arith.select %87, %89, %55 : vector<8x12xi1>, vector<8x12xf32>
    %91 = vector.broadcast %85 : vector<8x1xf32> to vector<8x12xf32>
    %92 = arith.cmpf oeq, %83, %91 : vector<8x12xf32>
    %93 = vector.broadcast %79 : vector<1x12xi1> to vector<8x12xi1>
    %94 = arith.andi %93, %92 : vector<8x12xi1>
    %c12_i32_17 = arith.constant 12 : i32
    %95 = vector.shape_cast %1 : vector<1x12xi32> to vector<1x12xi32>
    %96 = vector.broadcast %95 : vector<1x12xi32> to vector<8x12xi32>
    %97 = vector.broadcast %c12_i32_17 : i32 to vector<8x12xi32>
    %98 = arith.select %94, %96, %97 : vector<8x12xi1>, vector<8x12xi32>
    %cst_18 = arith.constant dense<2147483647> : vector<8xi32>
    %99 = vector.multi_reduction <minsi>, %98, %cst_18 [1] : vector<8x12xi32> to vector<8xi32>
    %100 = vector.shape_cast %99 : vector<8xi32> to vector<8x1xi32>
    %c7_i32_19 = arith.constant 7 : i32
    %101 = vector.broadcast %c7_i32_19 : i32 to vector<8x1xi32>
    %102 = arith.subi %100, %101 : vector<8x1xi32>
    %c2_i32 = arith.constant 2 : i32
    %103 = vector.broadcast %c2_i32 : i32 to vector<1x3xi32>
    %104 = arith.cmpi eq, %2, %103 : vector<1x3xi32>
    %105 = vector.shape_cast %104 : vector<1x3xi1> to vector<1x3xi1>
    %106 = vector.broadcast %105 : vector<1x3xi1> to vector<8x3xi1>
    %107 = vector.shape_cast %102 : vector<8x1xi32> to vector<8x1xi32>
    %108 = vector.broadcast %107 : vector<8x1xi32> to vector<8x3xi32>
    %109 = arith.select %106, %108, %74 : vector<8x3xi1>, vector<8x3xi32>
    %110 = arith.subf %0, %90 : vector<8x12xf32>
    %111 = math.exp %110 : vector<8x12xf32>
    %cst_20 = arith.constant 0.000000e+00 : f32
    %112 = vector.broadcast %cst_20 : f32 to vector<8x12xf32>
    %c0_i32_21 = arith.constant 0 : i32
    %113 = vector.broadcast %c0_i32_21 : i32 to vector<1x12xi32>
    %114 = arith.cmpi sge, %1, %113 : vector<1x12xi32>
    %c3_i32_22 = arith.constant 3 : i32
    %115 = vector.broadcast %c3_i32_22 : i32 to vector<1x12xi32>
    %116 = arith.cmpi slt, %1, %115 : vector<1x12xi32>
    %117 = arith.andi %114, %116 : vector<1x12xi1>
    %cst_23 = arith.constant 0.000000e+00 : f32
    %118 = vector.shape_cast %117 : vector<1x12xi1> to vector<1x12xi1>
    %119 = vector.broadcast %118 : vector<1x12xi1> to vector<8x12xi1>
    %120 = vector.broadcast %cst_23 : f32 to vector<8x12xf32>
    %121 = arith.select %119, %111, %120 : vector<8x12xi1>, vector<8x12xf32>
    %cst_24 = arith.constant dense<0.000000e+00> : vector<8xf32>
    %122 = vector.multi_reduction <add>, %121, %cst_24 [1] : vector<8x12xf32> to vector<8xf32>
    %123 = vector.shape_cast %122 : vector<8xf32> to vector<8x1xf32>
    %124 = math.log %123 : vector<8x1xf32>
    %125 = vector.shape_cast %117 : vector<1x12xi1> to vector<1x12xi1>
    %126 = vector.broadcast %125 : vector<1x12xi1> to vector<8x12xi1>
    %127 = vector.shape_cast %124 : vector<8x1xf32> to vector<8x1xf32>
    %128 = vector.broadcast %127 : vector<8x1xf32> to vector<8x12xf32>
    %129 = arith.select %126, %128, %112 : vector<8x12xi1>, vector<8x12xf32>
    %c3_i32_25 = arith.constant 3 : i32
    %130 = vector.broadcast %c3_i32_25 : i32 to vector<1x12xi32>
    %131 = arith.cmpi sge, %1, %130 : vector<1x12xi32>
    %c7_i32_26 = arith.constant 7 : i32
    %132 = vector.broadcast %c7_i32_26 : i32 to vector<1x12xi32>
    %133 = arith.cmpi slt, %1, %132 : vector<1x12xi32>
    %134 = arith.andi %131, %133 : vector<1x12xi1>
    %cst_27 = arith.constant 0.000000e+00 : f32
    %135 = vector.shape_cast %134 : vector<1x12xi1> to vector<1x12xi1>
    %136 = vector.broadcast %135 : vector<1x12xi1> to vector<8x12xi1>
    %137 = vector.broadcast %cst_27 : f32 to vector<8x12xf32>
    %138 = arith.select %136, %111, %137 : vector<8x12xi1>, vector<8x12xf32>
    %cst_28 = arith.constant dense<0.000000e+00> : vector<8xf32>
    %139 = vector.multi_reduction <add>, %138, %cst_28 [1] : vector<8x12xf32> to vector<8xf32>
    %140 = vector.shape_cast %139 : vector<8xf32> to vector<8x1xf32>
    %141 = math.log %140 : vector<8x1xf32>
    %142 = vector.shape_cast %134 : vector<1x12xi1> to vector<1x12xi1>
    %143 = vector.broadcast %142 : vector<1x12xi1> to vector<8x12xi1>
    %144 = vector.shape_cast %141 : vector<8x1xf32> to vector<8x1xf32>
    %145 = vector.broadcast %144 : vector<8x1xf32> to vector<8x12xf32>
    %146 = arith.select %143, %145, %129 : vector<8x12xi1>, vector<8x12xf32>
    %c7_i32_29 = arith.constant 7 : i32
    %147 = vector.broadcast %c7_i32_29 : i32 to vector<1x12xi32>
    %148 = arith.cmpi sge, %1, %147 : vector<1x12xi32>
    %c12_i32_30 = arith.constant 12 : i32
    %149 = vector.broadcast %c12_i32_30 : i32 to vector<1x12xi32>
    %150 = arith.cmpi slt, %1, %149 : vector<1x12xi32>
    %151 = arith.andi %148, %150 : vector<1x12xi1>
    %cst_31 = arith.constant 0.000000e+00 : f32
    %152 = vector.shape_cast %151 : vector<1x12xi1> to vector<1x12xi1>
    %153 = vector.broadcast %152 : vector<1x12xi1> to vector<8x12xi1>
    %154 = vector.broadcast %cst_31 : f32 to vector<8x12xf32>
    %155 = arith.select %153, %111, %154 : vector<8x12xi1>, vector<8x12xf32>
    %cst_32 = arith.constant dense<0.000000e+00> : vector<8xf32>
    %156 = vector.multi_reduction <add>, %155, %cst_32 [1] : vector<8x12xf32> to vector<8xf32>
    %157 = vector.shape_cast %156 : vector<8xf32> to vector<8x1xf32>
    %158 = math.log %157 : vector<8x1xf32>
    %159 = vector.shape_cast %151 : vector<1x12xi1> to vector<1x12xi1>
    %160 = vector.broadcast %159 : vector<1x12xi1> to vector<8x12xi1>
    %161 = vector.shape_cast %158 : vector<8x1xf32> to vector<8x1xf32>
    %162 = vector.broadcast %161 : vector<8x1xf32> to vector<8x12xf32>
    %163 = arith.select %160, %162, %146 : vector<8x12xi1>, vector<8x12xf32>
    %164 = arith.subf %0, %90 : vector<8x12xf32>
    %165 = arith.subf %164, %163 : vector<8x12xf32>
    %c0_33 = arith.constant 0 : index
    %c0_34 = arith.constant 0 : index
    %166 = vector.load %arg2[%c0_33, %c0_34] : memref<8x12xf32, #tpu.memory_space<vmem>>, vector<8x12xf32>
    tpu.vector_store %arg2[%c0_33, %c0_34], %165 {strides = array<i32>} : memref<8x12xf32, #tpu.memory_space<vmem>>, vector<8x12xf32>,
    %c0_35 = arith.constant 0 : index
    %c0_36 = arith.constant 0 : index
    %167 = vector.load %arg3[%c0_35, %c0_36] : memref<8x3xi32, #tpu.memory_space<vmem>>, vector<8x3xi32>
    tpu.vector_store %arg3[%c0_35, %c0_36], %109 {strides = array<i32>} : memref<8x3xi32, #tpu.memory_space<vmem>>, vector<8x3xi32>,
    return
  }
  func.func @transform_0(%arg0: i32) -> (i32, i32) {
    %c0_i32 = arith.constant 0 : i32
    %c0_i32_0 = arith.constant 0 : i32
    return %arg0, %c0_i32 : i32, i32
  }
  func.func @transform_1(%arg0: i32) -> (i32, i32) {
    %c0_i32 = arith.constant 0 : i32
    %c0_i32_0 = arith.constant 0 : i32
    return %arg0, %c0_i32 : i32, i32
  }
  func.func @transform_2(%arg0: i32) -> (i32, i32) {
    %c0_i32 = arith.constant 0 : i32
    %c0_i32_0 = arith.constant 0 : i32
    return %arg0, %c0_i32 : i32, i32
  }
}

</mosaic_0001>

<llo_original>
// kernel: tpu_custom_call.1
$region0: #{tpu_custom_call.1}
  #allocation0 [shape = 'u32[]', space=smem, size = 0x4, offset = 0x4, fixed_abs, tag = 'smem constant byte address 0x4 - core index']
  #allocation1 [shape = 'u32[72,128]{1,0:T(1,128)}', space=vmem, size = 0x9000, scoped, tag = 'internal scratch']
  %s0 = inlined_call_operand.hbm [shape: f32[16,12], index: 0, kind: input, shape index: {}]
  %s1 = inlined_call_operand.hbm [shape: f32[16,12], index: 1, kind: output, shape index: {0}]
  %s2 = inlined_call_operand.vmem [shape: s32[16,3], index: 2, kind: output, shape index: {1}]
  %3 = xla_tuple %s1, %s2
  %s4 = sld [smem:[#allocation0]]
  $region49: #{tpu_custom_call.1} parent=0
    _
  %s6 = ssub.s32 1, %s4
  %s7 = scalar_select 0, %s6, %s4
  $region1: #{tpu_custom_call.1} parent=0
    #allocation2 [shape = 'u8[8192]{0}', space=vmem, size = 0x2000, scoped, tag = 'input window, operand 0']
    #allocation3 [shape = 's32[2]{0}', space=sflag, size = 0x8, scoped, tag = 'scoped memory for tpu_custom_call.1']
    #allocation4 [shape = 's32[2]{0}', space=sflag, size = 0x8, scoped, tag = 'scoped memory for tpu_custom_call.1']
    #allocation5 [shape = 'u8[8192]{0}', space=vmem, size = 0x2000, scoped, tag = 'output window, operand 0']
    %8 = vsyncpa [#allocation3], 0
    %s9 = scalar_lea.sflag [#allocation3], 1
    %10 = vsyncpa %s9, 0
    %11 = vsyncpa [#allocation4], 0
    %s12 = scalar_lea.sflag [#allocation4], 1
    %13 = vsyncpa %s12, 0
    loop: start=0, step=1, limit=4
    $region2: #{tpu_custom_call.1} parent=1 // loop_pre_header
      _
    $region3: #{tpu_custom_call.1} parent=1 // loop_header
      %s15 = sphi 0, %s19
      %p16 = scmp.ge.s32.totalorder %s15, 4
      %s25 = sphi 0, %s27
      %s28 = sphi 0, %s25
      %s29 = sphi 0, %s28
      %s45 = sphi 0, %s29
      %s51 = sphi 0, %s53
      %s54 = sphi 0, %s51
      %s55 = sphi 0, %s54
      %s71 = sphi 0, %s55
      %s77 = sphi 0, %s79
      %s80 = sphi 0, %s77
      %s81 = sphi 0, %s80
      %s97 = sphi 0, %s81
    $region4: #{tpu_custom_call.1} parent=1 // loop_header_branch
      %18 = sbr.rel (%p16) target = $region8
    $region5: #{tpu_custom_call.1} parent=1 // loop_body
      %s20 = ssub.s32 %s15, 1
      %s21 = ssub.s32 %s15, 2
      %s22 = sadd.s32 %s15, 1
      %s23 = ssub.s32 %s15, %s22
      %p24 = scmp.eq.s32.totalorder %s23, 0
      %s26 = sadd.s32 %s25, 1
      %s27 = scalar_select %p24, %s25, %s26
      %p30 = pneg %p24
      %p31 = scmp.eq.s32.totalorder %s15, 1
      %p32 = por %p30, %p31
      %p33 = scmp.ne.s32.totalorder %s25, %s28
      %p34 = scmp.eq.s32.totalorder %s15, 0
      %p35 = por %p33, %p34
      %p36 = scmp.ne.s32.totalorder %s25, %s28
      %p37 = scmp.eq.s32.totalorder %s20, 1
      %p38 = por %p36, %p37
      %p39 = scmp.ne.s32.totalorder %s28, %s29
      %p40 = scmp.eq.s32.totalorder %s20, 0
      %p41 = por %p39, %p40
      %p42 = scmp.ne.s32.totalorder %s28, %s29
      %p43 = scmp.eq.s32.totalorder %s21, 1
      %p44 = por %p42, %p43
      %p46 = scmp.ne.s32.totalorder %s29, %s45
      %p47 = scmp.eq.s32.totalorder %s21, 0
      %p48 = por %p46, %p47
      %s49 = ssub.s32 %s15, %s22
      %p50 = scmp.eq.s32.totalorder %s49, 0
      %s52 = sadd.s32 %s51, 1
      %s53 = scalar_select %p50, %s51, %s52
      %p56 = pneg %p50
      %p57 = scmp.eq.s32.totalorder %s15, 1
      %p58 = por %p56, %p57
      %p59 = scmp.ne.s32.totalorder %s51, %s54
      %p60 = scmp.eq.s32.totalorder %s15, 0
      %p61 = por %p59, %p60
      %p62 = scmp.ne.s32.totalorder %s51, %s54
      %p63 = scmp.eq.s32.totalorder %s20, 1
      %p64 = por %p62, %p63
      %p65 = scmp.ne.s32.totalorder %s54, %s55
      %p66 = scmp.eq.s32.totalorder %s20, 0
      %p67 = por %p65, %p66
      %p68 = scmp.ne.s32.totalorder %s54, %s55
      %p69 = scmp.eq.s32.totalorder %s21, 1
      %p70 = por %p68, %p69
      %p72 = scmp.ne.s32.totalorder %s55, %s71
      %p73 = scmp.eq.s32.totalorder %s21, 0
      %p74 = por %p72, %p73
      %s75 = ssub.s32 %s15, %s22
      %p76 = scmp.eq.s32.totalorder %s75, 0
      %s78 = sadd.s32 %s77, 1
      %s79 = scalar_select %p76, %s77, %s78
      %p82 = pneg %p76
      %p83 = scmp.eq.s32.totalorder %s15, 1
      %p84 = por %p82, %p83
      %p85 = scmp.ne.s32.totalorder %s77, %s80
      %p86 = scmp.eq.s32.totalorder %s15, 0
      %p87 = por %p85, %p86
      %p88 = scmp.ne.s32.totalorder %s77, %s80
      %p89 = scmp.eq.s32.totalorder %s20, 1
      %p90 = por %p88, %p89
      %p91 = scmp.ne.s32.totalorder %s80, %s81
      %p92 = scmp.eq.s32.totalorder %s20, 0
      %p93 = por %p91, %p92
      %p94 = scmp.ne.s32.totalorder %s80, %s81
      %p95 = scmp.eq.s32.totalorder %s21, 1
      %p96 = por %p94, %p95
      %p98 = scmp.ne.s32.totalorder %s81, %s97
      %p99 = scmp.eq.s32.totalorder %s21, 0
      %p100 = por %p98, %p99
      %p101 = scmp.le.s32.totalorder 1, %s15
      %p102 = scmp.lt.s32.totalorder %s15, 3
      %p103 = pnand %p101, %p102
      %p104 = pneg %p103
      // Predicated region
      $region9: #{tpu_custom_call.1} parent=5 // pred_check
        _
      $region10: #{tpu_custom_call.1} parent=5 // pred_check_branch
        %106 = sbr.rel (%p103) target = $region12
      $region11: #{tpu_custom_call.1} parent=5 // pred_region
        %s107 = ssub.s32 %s15, 1
      $region12: #{tpu_custom_call.1} parent=5 // pred_fallthru
        _
      %p108 = scmp.lt.s32.totalorder %s15, 2
      // Predicated region
      $region13: #{tpu_custom_call.1} parent=5 // pred_check
        %p109 = pneg %p108
      $region14: #{tpu_custom_call.1} parent=5 // pred_check_branch
        %111 = sbr.rel (%p109) target = $region16
      $region15: #{tpu_custom_call.1} parent=5 // pred_region
        // Predicated region
        $region17: #{tpu_custom_call.1} parent=15 // pred_check
          %p112 = pneg %p35
        $region18: #{tpu_custom_call.1} parent=15 // pred_check_branch
          %114 = sbr.rel (%p112) target = $region20
        $region19: #{tpu_custom_call.1} parent=15 // pred_region
          %s115 = sand.u32 %s25, 1
          %s116 = scalar_lea.sflag [#allocation3], %s115
          %s117 = sand.u32 %s25, 1
          %s118 = smul.addr %s117, 8
          %s119 = scalar_lea.vmem [#allocation2], %s118
          %121 = vsyncadd %s116, 0
          %s122 = smul.addr %s15, 8
          %s123 = scalar_lea.hbm %s0, %s122
          %s125 = sshll.u32 %s123, 4
          %s126 = int_to_ptr.hbm [resolvable:$true] %s125
          %s127 = sshll.u32 %s119, 4
          %s128 = int_to_ptr.vmem [resolvable:$true] %s127
          %130 = dma.hbm_to_vmem [thread:$0]  %s126, 128, %s128, %s116
        $region20: #{tpu_custom_call.1} parent=15 // pred_fallthru
          _
      $region16: #{tpu_custom_call.1} parent=5 // pred_fallthru
        _
      %p131 = scmp.le.s32.totalorder 1, %s15
      %p132 = scmp.lt.s32.totalorder %s15, 3
      %p133 = pnand %p131, %p132
      %p134 = pneg %p133
      // Predicated region
      $region21: #{tpu_custom_call.1} parent=5 // pred_check
        _
      $region22: #{tpu_custom_call.1} parent=5 // pred_check_branch
        %136 = sbr.rel (%p133) target = $region24
      $region23: #{tpu_custom_call.1} parent=5 // pred_region
        %s137 = ssub.s32 %s15, 1
        %s138 = sand.u32 %s28, 1
        %s139 = scalar_lea.sflag [#allocation3], %s138
        %s140 = sand.u32 %s28, 1
        %s141 = smul.addr %s140, 8
        %s142 = scalar_lea.vmem [#allocation2], %s141
        // Predicated region
        $region25: #{tpu_custom_call.1} parent=23 // pred_check
          %p143 = pneg %p41
        $region26: #{tpu_custom_call.1} parent=23 // pred_check_branch
          %145 = sbr.rel (%p143) target = $region28
        $region27: #{tpu_custom_call.1} parent=23 // pred_region
          %147 = dma.done %s139, 128
        $region28: #{tpu_custom_call.1} parent=23 // pred_fallthru
          _
        %s148 = sand.u32 %s28, 1
        %s149 = scalar_lea.sflag [#allocation3], %s148
        %s150 = sand.u32 %s28, 1
        %s151 = smul.addr %s150, 8
        %s152 = scalar_lea.vmem [#allocation2], %s151
        %p153 = pneg %p41
        %p154 = pneg %p38
        %p155 = pneg %p67
        %p156 = pneg %p64
        %s157 = sand.u32 %s54, 1
        %s158 = scalar_lea.sflag [#allocation4], %s157
        %s159 = sand.u32 %s54, 1
        %s160 = smul.addr %s159, 8
        %s161 = scalar_lea.vmem [#allocation5], %s160
        %p162 = pneg %p93
        %p163 = pneg %p90
        %p164 = scmp.lt.s32.totalorder %s20, 1
        %s165 = scalar_select %p164, %s20, 1
        %s166 = smul.addr %s165, 8
        %s167 = scalar_lea.vmem %s2, %s166
        %p168 = scmp.lt.s32.totalorder %s20, 1
        %s169 = scalar_select %p168, %s20, 1
        %s170 = smul.addr %s169, 8
        %s171 = scalar_lea.vmem %s2, %s170
        %v172 = vld [vmem:[%s142] sm:$0xff]
        %v173 = vlaneseq
        %v174 = vand.u32 %v173, 127
        %vm175 = vcmp.ge.s32.totalorder %v174, 0
        %vm176 = vcmp.lt.s32.totalorder %v174, 3
        %vm177 = vmand %vm175, %vm176
        %v178 = vsel %vm177, 1, 0
        %vm179 = vcmp.eq.s32.totalorder %v178, 1
        %v180 = vsel %vm179, %v172, -inf
        %vm181 = vcmask 97280
        %v182 = vsel %vm181, %v180, -inf
        %183 = vmax.xlane.f32.xlu0 %v182
        %v184 = vpop.xlane.xlu0 %183
        %v185 = vsel %vm179, %v184, 0.0
        %vm186 = vcmp.eq.f32.partialorder %v180, %v184
        %vm187 = vmand %vm179, %vm186
        %v188 = vsel %vm187, %v174, 12
        %v189 = vsel %vm181, %v188, 2147483647
        %v190 = vand.u32 %v189, 65535
        %v191 = vshra.s32 %v189, 16
        %v192 = vcvt.s32.f32 %v190
        %v193 = vcvt.s32.f32 %v191
        %194 = vmin.xlane.f32.xlu0 %v193
        %v195 = vpop.xlane.xlu0 %194
        %vm196 = vcmp.eq.f32.partialorder %v193, %v195
        %v197 = vsel %vm196, %v192, inf
        %198 = vmin.xlane.f32.xlu0 %v197
        %v199 = vpop.xlane.xlu0 %198
        %v200 = vcvt.f32.s32 %v199
        %v201 = vcvt.f32.s32 %v195
        %v202 = vshll.u32 %v201, 16
        %v203 = vadd.s32 %v202, %v200
        %vm204 = vcmp.eq.s32.totalorder %v174, 0
        %v205 = vsel %vm204, 1, 0
        %vm206 = vcmp.eq.s32.totalorder %v205, 1
        %v207 = vsel %vm206, %v203, 0
        %vm208 = vcmp.ge.s32.totalorder %v174, 3
        %vm209 = vcmp.lt.s32.totalorder %v174, 7
        %vm210 = vmand %vm208, %vm209
        %v211 = vsel %vm210, 1, 0
        %vm212 = vcmp.eq.s32.totalorder %v211, 1
        %v213 = vsel %vm212, %v172, -inf
        %v214 = vsel %vm181, %v213, -inf
        %215 = vmax.xlane.f32.xlu0 %v214
        %v216 = vpop.xlane.xlu0 %215
        %v217 = vsel %vm212, %v216, %v185
        %vm218 = vcmp.eq.f32.partialorder %v213, %v216
        %vm219 = vmand %vm212, %vm218
        %v220 = vsel %vm219, %v174, 12
        %v221 = vsel %vm181, %v220, 2147483647
        %v222 = vand.u32 %v221, 65535
        %v223 = vshra.s32 %v221, 16
        %v224 = vcvt.s32.f32 %v222
        %v225 = vcvt.s32.f32 %v223
        %226 = vmin.xlane.f32.xlu0 %v225
        %v227 = vpop.xlane.xlu0 %226
        %vm228 = vcmp.eq.f32.partialorder %v225, %v227
        %v229 = vsel %vm228, %v224, inf
        %230 = vmin.xlane.f32.xlu0 %v229
        %v231 = vpop.xlane.xlu0 %230
        %v232 = vcvt.f32.s32 %v231
        %v233 = vcvt.f32.s32 %v227
        %v234 = vshll.u32 %v233, 16
        %v235 = vadd.s32 %v234, %v232
        %v236 = vsub.s32 %v235, 3
        %vm237 = vcmp.eq.s32.totalorder %v174, 1
        %v238 = vsel %vm237, 1, 0
        %vm239 = vcmp.eq.s32.totalorder %v238, 1
        %v240 = vsel %vm239, %v236, %v207
        %vm241 = vcmp.ge.s32.totalorder %v174, 7
        %vm242 = vcmp.lt.s32.totalorder %v174, 12
        %vm243 = vmand %vm241, %vm242
        %v244 = vsel %vm243, 1, 0
        %vm245 = vcmp.eq.s32.totalorder %v244, 1
        %v246 = vsel %vm245, %v172, -inf
        %v247 = vsel %vm181, %v246, -inf
        %248 = vmax.xlane.f32.xlu0 %v247
        %v249 = vpop.xlane.xlu0 %248
        %v250 = vsel %vm245, %v249, %v217
        %vm251 = vcmp.eq.f32.partialorder %v246, %v249
        %vm252 = vmand %vm245, %vm251
        %v253 = vsel %vm252, %v174, 12
        %v254 = vsel %vm181, %v253, 2147483647
        %v255 = vand.u32 %v254, 65535
        %v256 = vshra.s32 %v254, 16
        %v257 = vcvt.s32.f32 %v255
        %v258 = vcvt.s32.f32 %v256
        %259 = vmin.xlane.f32.xlu0 %v258
        %v260 = vpop.xlane.xlu0 %259
        %vm261 = vcmp.eq.f32.partialorder %v258, %v260
        %v262 = vsel %vm261, %v257, inf
        %263 = vmin.xlane.f32.xlu0 %v262
        %v264 = vpop.xlane.xlu0 %263
        %v265 = vcvt.f32.s32 %v264
        %v266 = vcvt.f32.s32 %v260
        %v267 = vshll.u32 %v266, 16
        %v268 = vadd.s32 %v267, %v265
        %v269 = vsub.s32 %v268, 7
        %vm270 = vcmp.eq.s32.totalorder %v174, 2
        %v271 = vsel %vm270, 1, 0
        %vm272 = vcmp.eq.s32.totalorder %v271, 1
        %v273 = vsel %vm272, %v269, %v240
        %v274 = vsub.f32 %v172, %v250
        %v275 = vmul.f32 %v274, 1.442695
        %v276 = vpow.pop %v275
        %v277 = vsel %vm179, %v276, 0.0
        %v278 = vsel %vm181, %v277, 0.0
        %279 = vadd.xlane.f32.xlu0 %v278
        %v280 = vpop.xlane.xlu0 %279
        %v281 = vlog2.pop %v280
        %v282 = vmul.f32 %v281, 0.6931472
        %v283 = vsel %vm179, %v282, 0.0
        %v284 = vsel %vm212, %v276, 0.0
        %v285 = vsel %vm181, %v284, 0.0
        %286 = vadd.xlane.f32.xlu0 %v285
        %v287 = vpop.xlane.xlu0 %286
        %v288 = vlog2.pop %v287
        %v289 = vmul.f32 %v288, 0.6931472
        %v290 = vsel %vm212, %v289, %v283
        %v291 = vsel %vm245, %v276, 0.0
        %v292 = vsel %vm181, %v291, 0.0
        %293 = vadd.xlane.f32.xlu0 %v292
        %v294 = vpop.xlane.xlu0 %293
        %v295 = vlog2.pop %v294
        %v296 = vmul.f32 %v295, 0.6931472
        %v297 = vsel %vm245, %v296, %v290
        %v298 = vsub.f32 %v274, %v297
        %299 = vst.msk [vmem:[%s161] sm:$0xff] %vm181, %v298
        %vm300 = vcmask 23552
        %301 = vst.msk [vmem:[%s171] sm:$0xff] %vm300, %v273
        %s302 = sand.u32 %s54, 1
        %s303 = scalar_lea.sflag [#allocation4], %s302
        %s304 = sand.u32 %s54, 1
        %s305 = smul.addr %s304, 8
        %s306 = scalar_lea.vmem [#allocation5], %s305
        %p307 = scmp.lt.s32.totalorder %s20, 1
        %s308 = scalar_select %p307, %s20, 1
        %s309 = smul.addr %s308, 8
        %s310 = scalar_lea.vmem %s2, %s309
        // Predicated region
        $region29: #{tpu_custom_call.1} parent=23 // pred_check
          %p311 = pneg %p64
        $region30: #{tpu_custom_call.1} parent=23 // pred_check_branch
          %313 = sbr.rel (%p311) target = $region32
        $region31: #{tpu_custom_call.1} parent=23 // pred_region
          %315 = vsyncadd %s303, 0
          %s316 = smul.addr %s20, 8
          %s317 = scalar_lea.hbm %s1, %s316
          %s319 = sshll.u32 %s306, 4
          %s320 = int_to_ptr.vmem [resolvable:$true] %s319
          %s321 = sshll.u32 %s317, 4
          %s322 = int_to_ptr.hbm [resolvable:$true] %s321
          %324 = dma.vmem_to_hbm [thread:$0]  %s320, 128, %s322, %s303
        $region32: #{tpu_custom_call.1} parent=23 // pred_fallthru
          _
        // Predicated region
        $region33: #{tpu_custom_call.1} parent=23 // pred_check
          %p325 = pneg %p90
        $region34: #{tpu_custom_call.1} parent=23 // pred_check_branch
          %327 = sbr.rel (%p325) target = $region36
        $region35: #{tpu_custom_call.1} parent=23 // pred_region
          _
        $region36: #{tpu_custom_call.1} parent=23 // pred_fallthru
          _
      $region24: #{tpu_custom_call.1} parent=5 // pred_fallthru
        _
      %p328 = scmp.le.s32.totalorder 2, %s15
      // Predicated region
      $region37: #{tpu_custom_call.1} parent=5 // pred_check
        %p329 = pneg %p328
      $region38: #{tpu_custom_call.1} parent=5 // pred_check_branch
        %331 = sbr.rel (%p329) target = $region40
      $region39: #{tpu_custom_call.1} parent=5 // pred_region
        %s332 = ssub.s32 %s15, 2
        // Predicated region
        $region41: #{tpu_custom_call.1} parent=39 // pred_check
          %p333 = pneg %p70
        $region42: #{tpu_custom_call.1} parent=39 // pred_check_branch
          %335 = sbr.rel (%p333) target = $region44
        $region43: #{tpu_custom_call.1} parent=39 // pred_region
          %s336 = sand.u32 %s55, 1
          %s337 = scalar_lea.sflag [#allocation4], %s336
          %s338 = sand.u32 %s55, 1
          %s339 = smul.addr %s338, 8
          %s340 = scalar_lea.vmem [#allocation5], %s339
          %342 = dma.done %s337, 128
        $region44: #{tpu_custom_call.1} parent=39 // pred_fallthru
          _
        // Predicated region
        $region45: #{tpu_custom_call.1} parent=39 // pred_check
          %p343 = pneg %p96
        $region46: #{tpu_custom_call.1} parent=39 // pred_check_branch
          %345 = sbr.rel (%p343) target = $region48
        $region47: #{tpu_custom_call.1} parent=39 // pred_region
          %p346 = scmp.lt.s32.totalorder %s21, 1
          %s347 = scalar_select %p346, %s21, 1
          %s348 = smul.addr %s347, 8
          %s349 = scalar_lea.vmem %s2, %s348
        $region48: #{tpu_custom_call.1} parent=39 // pred_fallthru
          _
      $region40: #{tpu_custom_call.1} parent=5 // pred_fallthru
        _
    $region6: #{tpu_custom_call.1} parent=1 // loop_footer
      %s19 = sadd.s32 1, %s15
    $region7: #{tpu_custom_call.1} parent=1 // loop_footer_branch
      %14 = sbr.rel target = $region3
    $region8: #{tpu_custom_call.1} parent=1 // loop_exit
      _
    %350 = vsyncpa [#allocation3], 1
    %s351 = scalar_lea.sflag [#allocation3], 1
    %352 = vsyncpa %s351, 1
    %353 = vsyncpa [#allocation4], 1
    %s354 = scalar_lea.sflag [#allocation4], 1
    %355 = vsyncpa %s354, 1

</llo_original>
